<compile_context>
chip_gen: v7x
topology: tpu7x:2x2x1
jax: 0.10.0
libtpu: 0.0.40
codegen_flags: <defaults>
</compile_context>

<pallas_src>
import jax
import jax.numpy as jnp
from jax.experimental import pallas as pl
from jax.experimental.pallas import tpu as pltpu

LANE = 128


def _round_up(x, m):
    return (x + m - 1) // m * m


def _pick_batch_blocks(B, S, min_rows_per_block=256):
    """Largest divisor split of B such that each block keeps >= min_rows_per_block
    folded rows (bh*S). Toy shapes collapse to 1 block (no per-step overhead on
    single-TC v5e/v6e, no under-filled per-core matmuls on v7x); big batches get
    double-buffered pipelining and, on v7x, 2-way core sharding via "parallel"."""
    best = 1
    for nb in range(2, B + 1):
        if B % nb == 0 and (B // nb) * S >= min_rows_per_block:
            best = nb
    return best


def _weight_spec(shape, single_buffer):
    index_map = lambda g: (0,) * len(shape)
    if single_buffer:
        # Constant-index weights: keep one resident VMEM copy instead of the
        # default double buffer (saves ~MiBs at real ViT sizes; matters for
        # v7x's 64 MiB VMEM).
        return pl.BlockSpec(shape, index_map, pipeline_mode=pl.Buffered(1))
    return pl.BlockSpec(shape, index_map)


def mha_kernel(x_ref, wqkv_ref, wo_ref, bo_ref, o_ref):
    bh, s, din = x_ref.shape
    dout_p = wqkv_ref.shape[1] // 3  # lane-padded output_dim (multiple of 128)

    # Fold batch*seq into the matmul M dim (reshape on f32, S multiple of 8 ->
    # layout no-op), then cast to bf16 in VMEM so the MXU runs at native rate.
    x2d = x_ref[...].reshape(bh * s, din).astype(jnp.bfloat16)

    # Fused QKV projection; 1/sqrt(Dout) is already folded into the Q columns.
    qkv = jnp.dot(x2d, wqkv_ref[...],
                  preferred_element_type=jnp.float32)          # (bh*s, 3*dout_p) f32

    # Column splits land on 128-lane boundaries (dout_p is a multiple of 128).
    q = qkv[:, :dout_p].reshape(bh, s, dout_p).astype(jnp.bfloat16)
    k = qkv[:, dout_p:2 * dout_p].reshape(bh, s, dout_p).astype(jnp.bfloat16)
    v = qkv[:, 2 * dout_p:].reshape(bh, s, dout_p).astype(jnp.bfloat16)

    # Scores: contraction over the last dim of both operands (no k.T relayout).
    scores = jnp.einsum("bqd,bkd->bqk", q, k,
                        preferred_element_type=jnp.float32)    # (bh, s, s) f32

    # Numerically stable softmax kept entirely in f32; reciprocal on the EUP.
    m = jnp.max(scores, axis=-1, keepdims=True)
    e = jnp.exp(scores - m)
    p = e * pl.reciprocal(jnp.sum(e, axis=-1, keepdims=True), approx=True)

    attn = jnp.einsum("bqk,bkd->bqd", p.astype(jnp.bfloat16), v,
                      preferred_element_type=jnp.float32)      # (bh, s, dout_p) f32

    # Output projection over the folded rows; bias added in f32 post-accumulation.
    out = jnp.dot(attn.reshape(bh * s, dout_p).astype(jnp.bfloat16), wo_ref[...],
                  preferred_element_type=jnp.float32) + bo_ref[...]
    o_ref[...] = out.reshape(bh, s, din).astype(o_ref.dtype)


def prepare_params(wq, wk, wv, wo, bo, param_dtype=jnp.bfloat16):
    """One-time weight prep, hoisted out of the per-call path.

    wq/wk/wv: (Din, Dout); wo: (Dout, Din); bo: (1, Din).
    Returns:
      wqkv_p: (Din, 3*dout_p) param_dtype, Q/K/V fused along columns, each
              chunk zero-padded to a 128-lane multiple, 1/sqrt(Dout) folded
              into the Q columns (so no in-kernel scale multiply).
      wo_p:   (dout_p, Din) param_dtype, rows zero-padded (columns untouched so
              the kernel writes the output unpadded — no separate slice op).
      bo_p:   (1, Din) float32 (added after f32 accumulation).
    """
    Din, Dout = wq.shape
    dout_p = _round_up(Dout, LANE)
    inv_scale = 1.0 / (float(Dout) ** 0.5)          # matches sqrt(k.size(-1))
    col_pad = ((0, 0), (0, dout_p - Dout))
    wqkv_p = jnp.concatenate(
        [jnp.pad(wq * inv_scale, col_pad),
         jnp.pad(wk, col_pad),
         jnp.pad(wv, col_pad)], axis=1).astype(param_dtype)
    wo_p = jnp.pad(wo, ((0, dout_p - Dout), (0, 0))).astype(param_dtype)
    bo_p = bo.astype(jnp.float32)
    return wqkv_p, wo_p, bo_p


@jax.jit
def multi_head_attention(x, wqkv_p, wo_p, bo_p):
    """x: (B, S, Din) float32; weights pre-processed by prepare_params()."""
    B, S, Din = x.shape

    num_blocks = _pick_batch_blocks(B, S)
    bh = B // num_blocks

    # Single-buffer only weights big enough for it to matter (real ViT sizes);
    # tiny toy weights keep the well-trodden default path.
    big_weights = wqkv_p.size * wqkv_p.dtype.itemsize >= (1 << 20)

    return pl.pallas_call(
        mha_kernel,
        out_shape=jax.ShapeDtypeStruct((B, S, Din), x.dtype),
        grid_spec=pltpu.PrefetchScalarGridSpec(
            num_scalar_prefetch=0,
            grid=(num_blocks,),
            in_specs=[
                # x block = full array dims on S/Din -> legal without padding.
                pl.BlockSpec((bh, S, Din), lambda g: (g, 0, 0)),
                _weight_spec(wqkv_p.shape, big_weights),   # fused Wqkv
                _weight_spec(wo_p.shape, big_weights),     # Wo
                _weight_spec(bo_p.shape, False),           # bias (tiny)
            ],
            out_specs=pl.BlockSpec((bh, S, Din), lambda g: (g, 0, 0)),
        ),
        compiler_params=pltpu.CompilerParams(
            dimension_semantics=("parallel",)),
    )(x, wqkv_p, wo_p, bo_p)


def reference(x, wq, wk, wv, wo, bo):
    q = x @ wq
    k = x @ wk
    v = x @ wv
    s = jnp.einsum("bqd,bkd->bqk", q, k) / (k.shape[-1] ** 0.5)
    p = jax.nn.softmax(s, axis=-1)
    a = jnp.einsum("bqk,bkd->bqd", p, v)
    return a @ wo + bo


if __name__ == "__main__":
    # Small shapes consistent with the module: batch=2, seq=8, input_dim=32.
    B, S, input_dim, num_heads = 2, 8, 32, 1
    output_dim = input_dim * num_heads

    key = jax.random.PRNGKey(0)
    kx, kqkv, kw, kb = jax.random.split(key, 4)

    # Input sequence (B, S, input_dim).
    x = jax.random.normal(kx, (B, S, input_dim), dtype=jnp.float32)

    # Deterministic parameter init, PyTorch shape conventions:
    #   qkv.weight:    (3*output_dim, input_dim)   (no bias)
    #   linear.weight: (input_dim, output_dim)
    #   linear.bias:   (input_dim,)
    w_qkv = jax.random.normal(kqkv, (3 * output_dim, input_dim), jnp.float32) * 0.1
    w_lin = jax.random.normal(kw, (input_dim, output_dim), jnp.float32) * 0.1
    b_lin = jax.random.normal(kb, (input_dim,), jnp.float32) * 0.1

    # torch.chunk(qkv_out, 3, dim=-1) == splitting W_qkv along its out dim.
    wq = w_qkv[:output_dim].T                 # (input_dim, output_dim)
    wk = w_qkv[output_dim:2 * output_dim].T   # (input_dim, output_dim)
    wv = w_qkv[2 * output_dim:].T             # (input_dim, output_dim)
    wo = w_lin.T                              # (output_dim, input_dim)
    bo = b_lin.reshape(1, input_dim)          # (1, input_dim)

    # One-time weight prep (hoisted out of the per-call path).
    wqkv_p, wo_p, bo_p = prepare_params(wq, wk, wv, wo, bo)

    out = multi_head_attention(x, wqkv_p, wo_p, bo_p)
    out = jax.block_until_ready(out)

    ref = reference(x, wq, wk, wv, wo, bo)
    assert out.shape == (B, S, input_dim)
    # Tolerance reflects bf16 MXU operands (f32 accumulation, f32 softmax) plus
    # the EUP approximate reciprocal in the softmax normalization.
    assert jnp.allclose(out, ref, atol=5e-2, rtol=5e-2), "mismatch vs reference"

    print("KERNEL_OK")
</pallas_src>

<mosaic_0001>
module attributes {stable_mosaic.version = 11 : i64} {
  func.func @mha_kernel(%arg0: i32, %arg1: memref<2x8x32xf32, #tpu.memory_space<vmem>>, %arg2: memref<32x384xbf16, #tpu.memory_space<vmem>>, %arg3: memref<128x32xbf16, #tpu.memory_space<vmem>>, %arg4: memref<1x32xf32, #tpu.memory_space<vmem>>, %arg5: memref<2x8x32xf32, #tpu.memory_space<vmem>>) attributes {dimension_semantics = [#tpu.dimension_semantics<parallel>], iteration_bounds = array<i64: 1>, scalar_prefetch = 0 : i64, scratch_operands = 0 : i64, tpu.core_type = #tpu.core_type<tc>, window_params = [{transform_indices = @transform_0, window_bounds = array<i64: 2, 8, 32>}, {pipeline_mode = #tpu.pipeline_mode<synchronous>, transform_indices = @transform_1, window_bounds = array<i64: 32, 384>}, {pipeline_mode = #tpu.pipeline_mode<synchronous>, transform_indices = @transform_2, window_bounds = array<i64: 128, 32>}, {pipeline_mode = #tpu.pipeline_mode<synchronous>, transform_indices = @transform_3, window_bounds = array<i64: 1, 32>}, {transform_indices = @transform_4, window_bounds = array<i64: 2, 8, 32>}]} {
    %c0 = arith.constant 0 : index
    %c0_0 = arith.constant 0 : index
    %c0_1 = arith.constant 0 : index
    %0 = vector.load %arg1[%c0, %c0_0, %c0_1] : memref<2x8x32xf32, #tpu.memory_space<vmem>>, vector<2x8x32xf32>
    %1 = vector.shape_cast %0 : vector<2x8x32xf32> to vector<16x32xf32>
    %2 = arith.truncf %1 : vector<16x32xf32> to vector<16x32xbf16>
    %c0_2 = arith.constant 0 : index
    %c0_3 = arith.constant 0 : index
    %3 = vector.load %arg2[%c0_2, %c0_3] : memref<32x384xbf16, #tpu.memory_space<vmem>>, vector<32x384xbf16>
    %cst = arith.constant dense<0.000000e+00> : vector<16x384xf32>
    %4 = tpu.matmul %2, %3, %cst {dimension_numbers = #tpu.dot_dimension_numbers<[1], [0], [0], [1], [0, 0, 1, 1], [], []>} : vector<16x32xbf16>, vector<32x384xbf16>, vector<16x384xf32> -> vector<16x384xf32>
    %5 = vector.extract_strided_slice %4 {offsets = [0, 0], sizes = [16, 128], strides = [1, 1]} : vector<16x384xf32> to vector<16x128xf32>
    %6 = vector.shape_cast %5 : vector<16x128xf32> to vector<2x8x128xf32>
    %7 = arith.truncf %6 : vector<2x8x128xf32> to vector<2x8x128xbf16>
    %8 = vector.extract_strided_slice %4 {offsets = [0, 128], sizes = [16, 128], strides = [1, 1]} : vector<16x384xf32> to vector<16x128xf32>
    %9 = vector.shape_cast %8 : vector<16x128xf32> to vector<2x8x128xf32>
    %10 = arith.truncf %9 : vector<2x8x128xf32> to vector<2x8x128xbf16>
    %11 = vector.extract_strided_slice %4 {offsets = [0, 256], sizes = [16, 128], strides = [1, 1]} : vector<16x384xf32> to vector<16x128xf32>
    %12 = vector.shape_cast %11 : vector<16x128xf32> to vector<2x8x128xf32>
    %13 = arith.truncf %12 : vector<2x8x128xf32> to vector<2x8x128xbf16>
    "tpu.trace_start"() <{level = 10 : i32, message = "bqd,bkd->bqk"}> : () -> ()
    %cst_4 = arith.constant dense<0.000000e+00> : vector<2x8x8xf32>
    %14 = tpu.matmul %7, %10, %cst_4 {dimension_numbers = #tpu.dot_dimension_numbers<[2], [2], [1], [1], [0, 0, 0, 1, 1, 1], [0], [0]>} : vector<2x8x128xbf16>, vector<2x8x128xbf16>, vector<2x8x8xf32> -> vector<2x8x8xf32>
    "tpu.trace_stop"() : () -> ()
    %cst_5 = arith.constant dense<0xFF800000> : vector<2x8xf32>
    %15 = vector.multi_reduction <maximumf>, %14, %cst_5 [2] : vector<2x8x8xf32> to vector<2x8xf32>
    %16 = vector.shape_cast %15 : vector<2x8xf32> to vector<2x8x1xf32>
    %17 = vector.broadcast %16 : vector<2x8x1xf32> to vector<2x8x8xf32>
    %18 = arith.subf %14, %17 : vector<2x8x8xf32>
    %19 = math.exp %18 : vector<2x8x8xf32>
    %cst_6 = arith.constant dense<0.000000e+00> : vector<2x8xf32>
    %20 = vector.multi_reduction <add>, %19, %cst_6 [2] : vector<2x8x8xf32> to vector<2x8xf32>
    %21 = vector.shape_cast %20 : vector<2x8xf32> to vector<2x8x1xf32>
    %22 = tpu.reciprocal %21 {approx = true} : vector<2x8x1xf32> -> vector<2x8x1xf32>
    %23 = vector.broadcast %22 : vector<2x8x1xf32> to vector<2x8x8xf32>
    %24 = arith.mulf %19, %23 : vector<2x8x8xf32>
    %25 = arith.truncf %24 : vector<2x8x8xf32> to vector<2x8x8xbf16>
    "tpu.trace_start"() <{level = 10 : i32, message = "bqk,bkd->bqd"}> : () -> ()
    %cst_7 = arith.constant dense<0.000000e+00> : vector<2x8x128xf32>
    %26 = tpu.matmul %25, %13, %cst_7 {dimension_numbers = #tpu.dot_dimension_numbers<[2], [1], [1], [2], [0, 0, 0, 1, 1, 2], [0], [0]>} : vector<2x8x8xbf16>, vector<2x8x128xbf16>, vector<2x8x128xf32> -> vector<2x8x128xf32>
    "tpu.trace_stop"() : () -> ()
    %27 = vector.shape_cast %26 : vector<2x8x128xf32> to vector<16x128xf32>
    %28 = arith.truncf %27 : vector<16x128xf32> to vector<16x128xbf16>
    %c0_8 = arith.constant 0 : index
    %c0_9 = arith.constant 0 : index
    %29 = vector.load %arg3[%c0_8, %c0_9] : memref<128x32xbf16, #tpu.memory_space<vmem>>, vector<128x32xbf16>
    %cst_10 = arith.constant dense<0.000000e+00> : vector<16x32xf32>
    %30 = tpu.matmul %28, %29, %cst_10 {dimension_numbers = #tpu.dot_dimension_numbers<[1], [0], [0], [1], [0, 0, 1, 1], [], []>} : vector<16x128xbf16>, vector<128x32xbf16>, vector<16x32xf32> -> vector<16x32xf32>
    %c0_11 = arith.constant 0 : index
    %c0_12 = arith.constant 0 : index
    %31 = vector.load %arg4[%c0_11, %c0_12] : memref<1x32xf32, #tpu.memory_space<vmem>>, vector<1x32xf32>
    %32 = vector.broadcast %31 : vector<1x32xf32> to vector<16x32xf32>
    %33 = arith.addf %30, %32 : vector<16x32xf32>
    %34 = vector.shape_cast %33 : vector<16x32xf32> to vector<2x8x32xf32>
    %c0_13 = arith.constant 0 : index
    %c0_14 = arith.constant 0 : index
    %c0_15 = arith.constant 0 : index
    %35 = vector.load %arg5[%c0_13, %c0_14, %c0_15] : memref<2x8x32xf32, #tpu.memory_space<vmem>>, vector<2x8x32xf32>
    tpu.vector_store %arg5[%c0_13, %c0_14, %c0_15], %34 {strides = array<i32>} : memref<2x8x32xf32, #tpu.memory_space<vmem>>, vector<2x8x32xf32>,
    return
  }
  func.func @transform_0(%arg0: i32) -> (i32, i32, i32) {
    %c0_i32 = arith.constant 0 : i32
    %c0_i32_0 = arith.constant 0 : i32
    %c0_i32_1 = arith.constant 0 : i32
    return %arg0, %c0_i32, %c0_i32_0 : i32, i32, i32
  }
  func.func @transform_1(%arg0: i32) -> (i32, i32) {
    %c0_i32 = arith.constant 0 : i32
    %c0_i32_0 = arith.constant 0 : i32
    %c0_i32_1 = arith.constant 0 : i32
    return %c0_i32, %c0_i32_0 : i32, i32
  }
  func.func @transform_2(%arg0: i32) -> (i32, i32) {
    %c0_i32 = arith.constant 0 : i32
    %c0_i32_0 = arith.constant 0 : i32
    %c0_i32_1 = arith.constant 0 : i32
    return %c0_i32, %c0_i32_0 : i32, i32
  }
  func.func @transform_3(%arg0: i32) -> (i32, i32) {
    %c0_i32 = arith.constant 0 : i32
    %c0_i32_0 = arith.constant 0 : i32
    %c0_i32_1 = arith.constant 0 : i32
    return %c0_i32, %c0_i32_0 : i32, i32
  }
  func.func @transform_4(%arg0: i32) -> (i32, i32, i32) {
    %c0_i32 = arith.constant 0 : i32
    %c0_i32_0 = arith.constant 0 : i32
    %c0_i32_1 = arith.constant 0 : i32
    return %arg0, %c0_i32, %c0_i32_0 : i32, i32, i32
  }
}

</mosaic_0001>

<llo_original>
// kernel: multi_head_attention.1
$region0: #{multi_head_attention.1}
  #allocation0 [shape = 'u32[]', space=smem, size = 0x4, offset = 0x4, fixed_abs, tag = 'smem constant byte address 0x4 - core index']
  #allocation1 [shape = 'u32[144,128]{1,0:T(1,128)}', space=vmem, size = 0x12000, scoped, tag = 'internal scratch']
  %s0 = inlined_call_operand.vmem [shape: f32[2,8,32], index: 0, kind: input, shape index: {}]
  %s1 = inlined_call_operand.vmem [shape: bf16[32,384], index: 1, kind: input, shape index: {}]
  %s2 = inlined_call_operand.vmem [shape: bf16[128,32], index: 2, kind: input, shape index: {}]
  %s3 = inlined_call_operand.vmem [shape: f32[1,32], index: 3, kind: input, shape index: {}]
  %s4 = inlined_call_operand.hbm [shape: f32[2,8,32], index: 4, kind: output, shape index: {}]
  %s5 = sld [smem:[#allocation0]]
  $region26: #{multi_head_attention.1} parent=0
    _
  %s7 = ssub.s32 1, %s5
  %s8 = scalar_select 0, %s7, %s5
  $region1: #{multi_head_attention.1} parent=0
    #allocation2 [shape = 'u8[8192]{0}', space=vmem, size = 0x2000, scoped, tag = 'output window, operand 0, single buffered']
    #allocation3 [shape = 's32[1]{0}', space=sflag, size = 0x4, scoped, tag = 'scoped memory for multi_head_attention.1']
    %9 = vsyncpa [#allocation3], 0
    // Predicated region
    $region2: #{multi_head_attention.1} parent=1 // pred_check
      _
    $region3: #{multi_head_attention.1} parent=1 // pred_check_branch
      %11 = sbr.rel (0) target = $region5
    $region4: #{multi_head_attention.1} parent=1 // pred_region
      _
    $region5: #{multi_head_attention.1} parent=1 // pred_fallthru
      _
    // Predicated region
    $region6: #{multi_head_attention.1} parent=1 // pred_check
      _
    $region7: #{multi_head_attention.1} parent=1 // pred_check_branch
      %13 = sbr.rel (0) target = $region9
    $region8: #{multi_head_attention.1} parent=1 // pred_region
      _
    $region9: #{multi_head_attention.1} parent=1 // pred_fallthru
      _
    // Predicated region
    $region10: #{multi_head_attention.1} parent=1 // pred_check
      _
    $region11: #{multi_head_attention.1} parent=1 // pred_check_branch
      %15 = sbr.rel (0) target = $region13
    $region12: #{multi_head_attention.1} parent=1 // pred_region
      _
    $region13: #{multi_head_attention.1} parent=1 // pred_fallthru
      _
    // Predicated region
    $region14: #{multi_head_attention.1} parent=1 // pred_check
      _
    $region15: #{multi_head_attention.1} parent=1 // pred_check_branch
      %17 = sbr.rel (0) target = $region17
    $region16: #{multi_head_attention.1} parent=1 // pred_region
      _
    $region17: #{multi_head_attention.1} parent=1 // pred_fallthru
      _
    %v19 = vld [vmem:[%s0] sm:$0xff]
    %v20 = vld [vmem:[%s0 + $0x8] sm:$0xff]
    %v21 = vpack.c.bf16 %v20, %v19
    %v22 = vld [vmem:[%s1] sm:$0xff]
    %v23 = vld [vmem:[%s1 + $0x8] sm:$0xf]
    %v24 = vld [vmem:[%s1 + $0xc] sm:$0xff]
    %v25 = vld [vmem:[%s1 + $0x14] sm:$0xf]
    %v26 = vld [vmem:[%s1 + $0x18] sm:$0xff]
    %v27 = vld [vmem:[%s1 + $0x20] sm:$0xf]
    %v28 = vld [vmem:[%s1 + $0x24] sm:$0xff]
    %v29 = vld [vmem:[%s1 + $0x2c] sm:$0xf]
    %v38 = vunpack.c.l.b16 %v22
    %v39 = vunpack.c.h.b16 %v22
    %v40 = vunpack.c.l.b16 %v23
    %v41 = vunpack.c.l.b16 %v24
    %v42 = vunpack.c.h.b16 %v24
    %v43 = vunpack.c.l.b16 %v25
    %v44 = vunpack.c.l.b16 %v26
    %v45 = vunpack.c.h.b16 %v26
    %v46 = vunpack.c.l.b16 %v27
    %v47 = vunpack.c.l.b16 %v28
    %v48 = vunpack.c.h.b16 %v28
    %v49 = vunpack.c.l.b16 %v29
    %v50 = vpack.c.b16 %v41, %v38
    %v51 = vpack.c.b16 %v42, %v39
    %v52 = vpack.c.b16 %v43, %v40
    %v53 = vpack.c.b16 %v47, %v44
    %v54 = vpack.c.b16 %v48, %v45
    %v55 = vpack.c.b16 %v49, %v46
    %vm62 = vcmask 261120
    %v64 = vsel %vm62, %v21, 0
    %66 = vmatprep.subr.bf16.mxu0 %v51
    %67 = vmatpush1.bf16.msra.mxu0 %v50
    %68 = vmatprep.subr.bf16.mxu0 %v54
    %69 = vmatpush1.bf16.msra.mxu0 %v53
    %70 = vmatprep.subr.bf16.mxu0 0
    %71 = vmatpush1.bf16.msra.mxu0 0
    %72 = vmatprep.subr.bf16.mxu0 0
    %73 = vmatpush1.bf16.msra.mxu0 0
    %74 = vmatprep.subr.bf16.mxu0 0
    %75 = vmatpush1.bf16.msra.mxu0 0
    %76 = vmatprep.subr.bf16.mxu0 0
    %77 = vmatpush1.bf16.msra.mxu0 0
    %78 = vmatprep.subr.bf16.mxu0 0
    %79 = vmatpush1.bf16.msra.mxu0 0
    %80 = vmatprep.subr.bf16.mxu0 0
    %81 = vmatpush1.bf16.msra.mxu0 0
    %82 = vmatprep.subr.bf16.mxu0 0
    %83 = vmatpush1.bf16.msra.mxu0 0
    %84 = vmatprep.subr.bf16.mxu0 0
    %85 = vmatpush1.bf16.msra.mxu0 0
    %86 = vmatprep.subr.bf16.mxu0 0
    %87 = vmatpush1.bf16.msra.mxu0 0
    %88 = vmatprep.subr.bf16.mxu0 0
    %89 = vmatpush1.bf16.msra.mxu0 0
    %90 = vmatprep.subr.bf16.mxu0 0
    %91 = vmatpush1.bf16.msra.mxu0 0
    %92 = vmatprep.subr.bf16.mxu0 0
    %93 = vmatpush1.bf16.msra.mxu0 0
    %94 = vmatprep.subr.bf16.mxu0 0
    %95 = vmatpush1.bf16.msra.mxu0 0
    %96 = vmatprep.subr.bf16.mxu0 0
    %97 = vmatpush1.bf16.msra.mxu0 0
    %98 = vmatprep.mubr.bf16.mxu0 0
    %99 = vmatmul.mubr.bf16.gmra.mrb[0].mxu0 %v64
    %v100 = vpop.f32.mrb[0].mxu0
    %v101 = vadd.f32 0.0, %v100
    %v102 = vpop.f32.mrb[0].mxu0
    %v103 = vadd.f32 0.0, %v102
    %v104 = vpop.f32.mrb[0].mxu0
    %v105 = vadd.f32 0.0, %v104
    %v106 = vpop.f32.mrb[0].mxu0
    %v107 = vadd.f32 0.0, %v106
    %108 = vdwg.mxu0
    %109 = vmatprep.subr.bf16.mxu0 0
    %110 = vmatpush1.bf16.msra.mxu0 %v52
    %111 = vmatprep.subr.bf16.mxu0 0
    %112 = vmatpush1.bf16.msra.mxu0 %v55
    %113 = vmatprep.subr.bf16.mxu0 0
    %114 = vmatpush1.bf16.msra.mxu0 0
    %115 = vmatprep.subr.bf16.mxu0 0
    %116 = vmatpush1.bf16.msra.mxu0 0
    %117 = vmatprep.subr.bf16.mxu0 0
    %118 = vmatpush1.bf16.msra.mxu0 0
    %119 = vmatprep.subr.bf16.mxu0 0
    %120 = vmatpush1.bf16.msra.mxu0 0
    %121 = vmatprep.subr.bf16.mxu0 0
    %122 = vmatpush1.bf16.msra.mxu0 0
    %123 = vmatprep.subr.bf16.mxu0 0
    %124 = vmatpush1.bf16.msra.mxu0 0
    %125 = vmatprep.subr.bf16.mxu0 0
    %126 = vmatpush1.bf16.msra.mxu0 0
    %127 = vmatprep.subr.bf16.mxu0 0
    %128 = vmatpush1.bf16.msra.mxu0 0
    %129 = vmatprep.subr.bf16.mxu0 0
    %130 = vmatpush1.bf16.msra.mxu0 0
    %131 = vmatprep.subr.bf16.mxu0 0
    %132 = vmatpush1.bf16.msra.mxu0 0
    %133 = vmatprep.subr.bf16.mxu0 0
    %134 = vmatpush1.bf16.msra.mxu0 0
    %135 = vmatprep.subr.bf16.mxu0 0
    %136 = vmatpush1.bf16.msra.mxu0 0
    %137 = vmatprep.subr.bf16.mxu0 0
    %138 = vmatpush1.bf16.msra.mxu0 0
    %139 = vmatprep.subr.bf16.mxu0 0
    %140 = vmatpush1.bf16.msra.mxu0 0
    %141 = vmatprep.mubr.bf16.mxu0 0
    %142 = vmatmul.mubr.bf16.gmra.mrb[0].mxu0 %v64
    %v143 = vpop.f32.mrb[0].mxu0
    %v144 = vadd.f32 0.0, %v143
    %v145 = vpop.f32.mrb[0].mxu0
    %v146 = vpop.f32.mrb[0].mxu0
    %v147 = vadd.f32 0.0, %v146
    %v148 = vpop.f32.mrb[0].mxu0
    %149 = vdwg.mxu0
    %v150 = vpack.c.bf16 %v101, %v101
    %v151 = vpack.c.bf16 %v105, %v105
    %v152 = vpack.c.bf16 %v103, %v103
    %v153 = vpack.c.bf16 %v107, %v107
    %v154 = vpack.c.bf16 %v144, %v144
    %v155 = vpack.c.bf16 %v147, %v147
    %156 = vmatprep.subr.bf16.mxu0 0
    %157 = vmatpush1.bf16.xpose.msra.mxu0 %v152
    %158 = vmatprep.subr.bf16.mxu0 0
    %159 = vmatpush1.bf16.xpose.msra.mxu0 0
    %160 = vmatprep.subr.bf16.mxu0 0
    %161 = vmatpush1.bf16.xpose.msra.mxu0 0
    %162 = vmatprep.subr.bf16.mxu0 0
    %163 = vmatpush1.bf16.xpose.msra.mxu0 0
    %164 = vmatprep.subr.bf16.mxu0 0
    %165 = vmatpush1.bf16.xpose.msra.mxu0 0
    %166 = vmatprep.subr.bf16.mxu0 0
    %167 = vmatpush1.bf16.xpose.msra.mxu0 0
    %168 = vmatprep.subr.bf16.mxu0 0
    %169 = vmatpush1.bf16.xpose.msra.mxu0 0
    %170 = vmatprep.subr.bf16.mxu0 0
    %171 = vmatpush1.bf16.xpose.msra.mxu0 0
    %172 = vmatprep.subr.bf16.mxu0 0
    %173 = vmatpush1.bf16.xpose.msra.mxu0 0
    %174 = vmatprep.subr.bf16.mxu0 0
    %175 = vmatpush1.bf16.xpose.msra.mxu0 0
    %176 = vmatprep.subr.bf16.mxu0 0
    %177 = vmatpush1.bf16.xpose.msra.mxu0 0
    %178 = vmatprep.subr.bf16.mxu0 0
    %179 = vmatpush1.bf16.xpose.msra.mxu0 0
    %180 = vmatprep.subr.bf16.mxu0 0
    %181 = vmatpush1.bf16.xpose.msra.mxu0 0
    %182 = vmatprep.subr.bf16.mxu0 0
    %183 = vmatpush1.bf16.xpose.msra.mxu0 0
    %184 = vmatprep.subr.bf16.mxu0 0
    %185 = vmatpush1.bf16.xpose.msra.mxu0 0
    %186 = vmatprep.subr.bf16.mxu0 0
    %187 = vmatpush1.bf16.xpose.msra.mxu0 0
    %188 = vmatprep.mubr.bf16.mxu0 0
    %189 = vmatmul.mubr.bf16.gmra.mrb[0].mxu0 %v150
    %v190 = vpop.f32.mrb[0].mxu0
    %v191 = vadd.f32 0.0, %v190
    %v192 = vpop.f32.mrb[0].mxu0
    %v193 = vpop.f32.mrb[0].mxu0
    %v194 = vpop.f32.mrb[0].mxu0
    %195 = vdwg.mxu0
    %196 = vmatprep.subr.bf16.mxu0 0
    %197 = vmatpush1.bf16.xpose.msra.mxu0 %v153
    %198 = vmatprep.subr.bf16.mxu0 0
    %199 = vmatpush1.bf16.xpose.msra.mxu0 0
    %200 = vmatprep.subr.bf16.mxu0 0
    %201 = vmatpush1.bf16.xpose.msra.mxu0 0
    %202 = vmatprep.subr.bf16.mxu0 0
    %203 = vmatpush1.bf16.xpose.msra.mxu0 0
    %204 = vmatprep.subr.bf16.mxu0 0
    %205 = vmatpush1.bf16.xpose.msra.mxu0 0
    %206 = vmatprep.subr.bf16.mxu0 0
    %207 = vmatpush1.bf16.xpose.msra.mxu0 0
    %208 = vmatprep.subr.bf16.mxu0 0
    %209 = vmatpush1.bf16.xpose.msra.mxu0 0
    %210 = vmatprep.subr.bf16.mxu0 0
    %211 = vmatpush1.bf16.xpose.msra.mxu0 0
    %212 = vmatprep.subr.bf16.mxu0 0
    %213 = vmatpush1.bf16.xpose.msra.mxu0 0
    %214 = vmatprep.subr.bf16.mxu0 0
    %215 = vmatpush1.bf16.xpose.msra.mxu0 0
    %216 = vmatprep.subr.bf16.mxu0 0
    %217 = vmatpush1.bf16.xpose.msra.mxu0 0
    %218 = vmatprep.subr.bf16.mxu0 0
    %219 = vmatpush1.bf16.xpose.msra.mxu0 0
    %220 = vmatprep.subr.bf16.mxu0 0
    %221 = vmatpush1.bf16.xpose.msra.mxu0 0
    %222 = vmatprep.subr.bf16.mxu0 0
    %223 = vmatpush1.bf16.xpose.msra.mxu0 0
    %224 = vmatprep.subr.bf16.mxu0 0
    %225 = vmatpush1.bf16.xpose.msra.mxu0 0
    %226 = vmatprep.subr.bf16.mxu0 0
    %227 = vmatpush1.bf16.xpose.msra.mxu0 0
    %228 = vmatprep.mubr.bf16.mxu0 0
    %229 = vmatmul.mubr.bf16.gmra.mrb[0].mxu0 %v151
    %v230 = vpop.f32.mrb[0].mxu0
    %v231 = vadd.f32 0.0, %v230
    %v232 = vpop.f32.mrb[0].mxu0
    %v233 = vpop.f32.mrb[0].mxu0
    %v234 = vpop.f32.mrb[0].mxu0
    %235 = vdwg.mxu0
    %vm236 = vcmask 64512
    %v237 = vsel %vm236, %v191, -inf
    %238 = vmax.xlane.f32.xlu0 %v237
    %v239 = vpop.xlane.xlu0 %238
    %v240 = vsel %vm236, %v231, -inf
    %241 = vmax.xlane.f32.xlu0 %v240
    %v242 = vpop.xlane.xlu0 %241
    %v243 = vsub.f32 %v191, %v239
    %v244 = vsub.f32 %v231, %v242
    %v245 = vmul.f32 %v243, 1.442695
    %v246 = vpow.pop %v245
    %v247 = vmul.f32 %v244, 1.442695
    %v248 = vpow.pop %v247
    %v249 = vsel %vm236, %v246, 0.0
    %250 = vadd.xlane.f32.xlu0 %v249
    %v251 = vpop.xlane.xlu0 %250
    %v252 = vsel %vm236, %v248, 0.0
    %253 = vadd.xlane.f32.xlu0 %v252
    %v254 = vpop.xlane.xlu0 %253
    %v255 = vrcp.pop %v251
    %v256 = vrcp.pop %v254
    %v257 = vmul.f32 %v246, %v255
    %v258 = vmul.f32 %v248, %v256
    %v259 = vpack.c.bf16 %v257, %v257
    %v260 = vpack.c.bf16 %v258, %v258
    %v262 = vsel %vm236, %v259, 0
    %vm264 = vcmask 1043456
    %v266 = vsel %vm264, %v154, 0
    %268 = vmatprep.subr.bf16.mxu0 0
    %269 = vmatpush1.bf16.msra.mxu0 %v266
    %270 = vmatprep.subr.bf16.mxu0 0
    %271 = vmatpush1.bf16.msra.mxu0 0
    %272 = vmatprep.subr.bf16.mxu0 0
    %273 = vmatpush1.bf16.msra.mxu0 0
    %274 = vmatprep.subr.bf16.mxu0 0
    %275 = vmatpush1.bf16.msra.mxu0 0
    %276 = vmatprep.subr.bf16.mxu0 0
    %277 = vmatpush1.bf16.msra.mxu0 0
    %278 = vmatprep.subr.bf16.mxu0 0
    %279 = vmatpush1.bf16.msra.mxu0 0
    %280 = vmatprep.subr.bf16.mxu0 0
    %281 = vmatpush1.bf16.msra.mxu0 0
    %282 = vmatprep.subr.bf16.mxu0 0
    %283 = vmatpush1.bf16.msra.mxu0 0
    %284 = vmatprep.subr.bf16.mxu0 0
    %285 = vmatpush1.bf16.msra.mxu0 0
    %286 = vmatprep.subr.bf16.mxu0 0
    %287 = vmatpush1.bf16.msra.mxu0 0
    %288 = vmatprep.subr.bf16.mxu0 0
    %289 = vmatpush1.bf16.msra.mxu0 0
    %290 = vmatprep.subr.bf16.mxu0 0
    %291 = vmatpush1.bf16.msra.mxu0 0
    %292 = vmatprep.subr.bf16.mxu0 0
    %293 = vmatpush1.bf16.msra.mxu0 0
    %294 = vmatprep.subr.bf16.mxu0 0
    %295 = vmatpush1.bf16.msra.mxu0 0
    %296 = vmatprep.subr.bf16.mxu0 0
    %297 = vmatpush1.bf16.msra.mxu0 0
    %298 = vmatprep.subr.bf16.mxu0 0
    %299 = vmatpush1.bf16.msra.mxu0 0
    %300 = vmatprep.mubr.bf16.mxu0 0
    %301 = vmatmul.mubr.bf16.gmra.mrb[0].mxu0 %v262
    %v302 = vpop.f32.mrb[0].mxu0
    %v303 = vadd.f32 0.0, %v302
    %v304 = vpop.f32.mrb[0].mxu0
    %v305 = vpop.f32.mrb[0].mxu0
    %v306 = vpop.f32.mrb[0].mxu0
    %307 = vdwg.mxu0
    %v309 = vsel %vm236, %v260, 0
    %v312 = vsel %vm264, %v155, 0
    %314 = vmatprep.subr.bf16.mxu0 0
    %315 = vmatpush1.bf16.msra.mxu0 %v312
    %316 = vmatprep.subr.bf16.mxu0 0
    %317 = vmatpush1.bf16.msra.mxu0 0
    %318 = vmatprep.subr.bf16.mxu0 0
    %319 = vmatpush1.bf16.msra.mxu0 0
    %320 = vmatprep.subr.bf16.mxu0 0
    %321 = vmatpush1.bf16.msra.mxu0 0
    %322 = vmatprep.subr.bf16.mxu0 0
    %323 = vmatpush1.bf16.msra.mxu0 0
    %324 = vmatprep.subr.bf16.mxu0 0
    %325 = vmatpush1.bf16.msra.mxu0 0
    %326 = vmatprep.subr.bf16.mxu0 0
    %327 = vmatpush1.bf16.msra.mxu0 0
    %328 = vmatprep.subr.bf16.mxu0 0
    %329 = vmatpush1.bf16.msra.mxu0 0
    %330 = vmatprep.subr.bf16.mxu0 0
    %331 = vmatpush1.bf16.msra.mxu0 0
    %332 = vmatprep.subr.bf16.mxu0 0
    %333 = vmatpush1.bf16.msra.mxu0 0
    %334 = vmatprep.subr.bf16.mxu0 0
    %335 = vmatpush1.bf16.msra.mxu0 0
    %336 = vmatprep.subr.bf16.mxu0 0
    %337 = vmatpush1.bf16.msra.mxu0 0
    %338 = vmatprep.subr.bf16.mxu0 0
    %339 = vmatpush1.bf16.msra.mxu0 0
    %340 = vmatprep.subr.bf16.mxu0 0
    %341 = vmatpush1.bf16.msra.mxu0 0
    %342 = vmatprep.subr.bf16.mxu0 0
    %343 = vmatpush1.bf16.msra.mxu0 0
    %344 = vmatprep.subr.bf16.mxu0 0
    %345 = vmatpush1.bf16.msra.mxu0 0
    %346 = vmatprep.mubr.bf16.mxu0 0
    %347 = vmatmul.mubr.bf16.gmra.mrb[0].mxu0 %v309
    %v348 = vpop.f32.mrb[0].mxu0
    %v349 = vadd.f32 0.0, %v348
    %v350 = vpop.f32.mrb[0].mxu0
    %v351 = vpop.f32.mrb[0].mxu0
    %v352 = vpop.f32.mrb[0].mxu0
    %353 = vdwg.mxu0
    %v354 = vpack.c.bf16 %v349, %v303
    %v355 = vld [vmem:[%s2] sm:$0xf]
    %v356 = vld [vmem:[%s2 + $0x4] sm:$0xf]
    %v357 = vld [vmem:[%s2 + $0x8] sm:$0xf]
    %v358 = vld [vmem:[%s2 + $0xc] sm:$0xf]
    %v359 = vld [vmem:[%s2 + $0x10] sm:$0xf]
    %v360 = vld [vmem:[%s2 + $0x14] sm:$0xf]
    %v361 = vld [vmem:[%s2 + $0x18] sm:$0xf]
    %v362 = vld [vmem:[%s2 + $0x1c] sm:$0xf]
    %v363 = vld [vmem:[%s2 + $0x20] sm:$0xf]
    %v364 = vld [vmem:[%s2 + $0x24] sm:$0xf]
    %v365 = vld [vmem:[%s2 + $0x28] sm:$0xf]
    %v366 = vld [vmem:[%s2 + $0x2c] sm:$0xf]
    %v367 = vld [vmem:[%s2 + $0x30] sm:$0xf]
    %v368 = vld [vmem:[%s2 + $0x34] sm:$0xf]
    %v369 = vld [vmem:[%s2 + $0x38] sm:$0xf]
    %v370 = vld [vmem:[%s2 + $0x3c] sm:$0xf]
    %v371 = vld [vmem:[%s3] sm:$0x1]
    %v373 = vlaneseq
    %v374 = vshrl.u32 %v373, 7
    %v375 = vsub.s32 0, %v374
    %v376 = vrot.slane %v371, %v375
    %v394 = vunpack.c.l.b16 %v355
    %v395 = vunpack.c.l.b16 %v356
    %v396 = vunpack.c.l.b16 %v357
    %v397 = vunpack.c.l.b16 %v358
    %v398 = vunpack.c.l.b16 %v359
    %v399 = vunpack.c.l.b16 %v360
    %v400 = vunpack.c.l.b16 %v361
    %v401 = vunpack.c.l.b16 %v362
    %v402 = vunpack.c.l.b16 %v363
    %v403 = vunpack.c.l.b16 %v364
    %v404 = vunpack.c.l.b16 %v365
    %v405 = vunpack.c.l.b16 %v366
    %v406 = vunpack.c.l.b16 %v367
    %v407 = vunpack.c.l.b16 %v368
    %v408 = vunpack.c.l.b16 %v369
    %v409 = vunpack.c.l.b16 %v370
    %v410 = vpack.c.b16 %v395, %v394
    %v411 = vpack.c.b16 %v397, %v396
    %v412 = vpack.c.b16 %v399, %v398
    %v413 = vpack.c.b16 %v401, %v400
    %v414 = vpack.c.b16 %v403, %v402
    %v415 = vpack.c.b16 %v405, %v404
    %v416 = vpack.c.b16 %v407, %v406
    %v417 = vpack.c.b16 %v409, %v408
    %426 = vmatprep.subr.bf16.mxu0 0
    %427 = vmatpush1.bf16.msra.mxu0 %v410
    %428 = vmatprep.subr.bf16.mxu0 0
    %429 = vmatpush1.bf16.msra.mxu0 %v411
    %430 = vmatprep.subr.bf16.mxu0 0
    %431 = vmatpush1.bf16.msra.mxu0 %v412
    %432 = vmatprep.subr.bf16.mxu0 0
    %433 = vmatpush1.bf16.msra.mxu0 %v413
    %434 = vmatprep.subr.bf16.mxu0 0
    %435 = vmatpush1.bf16.msra.mxu0 %v414
    %436 = vmatprep.subr.bf16.mxu0 0
    %437 = vmatpush1.bf16.msra.mxu0 %v415
    %438 = vmatprep.subr.bf16.mxu0 0
    %439 = vmatpush1.bf16.msra.mxu0 %v416
    %440 = vmatprep.subr.bf16.mxu0 0
    %441 = vmatpush1.bf16.msra.mxu0 %v417
    %442 = vmatprep.subr.bf16.mxu0 0
    %443 = vmatpush1.bf16.msra.mxu0 0
    %444 = vmatprep.subr.bf16.mxu0 0
    %445 = vmatpush1.bf16.msra.mxu0 0
    %446 = vmatprep.subr.bf16.mxu0 0
    %447 = vmatpush1.bf16.msra.mxu0 0
    %448 = vmatprep.subr.bf16.mxu0 0
    %449 = vmatpush1.bf16.msra.mxu0 0
    %450 = vmatprep.subr.bf16.mxu0 0
    %451 = vmatpush1.bf16.msra.mxu0 0
    %452 = vmatprep.subr.bf16.mxu0 0
    %453 = vmatpush1.bf16.msra.mxu0 0
    %454 = vmatprep.subr.bf16.mxu0 0
    %455 = vmatpush1.bf16.msra.mxu0 0
    %456 = vmatprep.subr.bf16.mxu0 0
    %457 = vmatpush1.bf16.msra.mxu0 0
    %458 = vmatprep.mubr.bf16.mxu0 0
    %459 = vmatmul.mubr.bf16.gmra.mrb[0].mxu0 %v354
    %v460 = vpop.f32.mrb[0].mxu0
    %v461 = vadd.f32 %v376, %v460
    %v462 = vpop.f32.mrb[0].mxu0
    %v463 = vpop.f32.mrb[0].mxu0
    %v464 = vadd.f32 %v376, %v463
    %v465 = vpop.f32.mrb[0].mxu0
    %466 = vdwg.mxu0
    %467 = vst.msk [vmem:[#allocation2] sm:$0xff] %vm62, %v461
    %468 = vst.msk [vmem:[#allocation2 + $0x8] sm:$0xff] %vm62, %v464
    // Predicated region
    $region18: #{multi_head_attention.1} parent=1 // pred_check
      _
    $region19: #{multi_head_attention.1} parent=1 // pred_check_branch
      %470 = sbr.rel (0) target = $region21
    $region20: #{multi_head_attention.1} parent=1 // pred_region
      %s472 = ssub.s32 256, 256
      %473 = vsyncadd [#allocation3], %s472
      %s474 = sshll.u32 [#allocation2], 4
      %s475 = int_to_ptr.vmem [resolvable:$true] %s474
      %480 = dma.vmem_to_hbm [thread:$0]  %s475, 256, %s4, [#allocation3], 128, 128, 8
    $region21: #{multi_head_attention.1} parent=1 // pred_fallthru
      _
    // Predicated region
    $region22: #{multi_head_attention.1} parent=1 // pred_check
      _
    $region23: #{multi_head_attention.1} parent=1 // pred_check_branch
      %482 = sbr.rel (0) target = $region25
    $region24: #{multi_head_attention.1} parent=1 // pred_region
      %483 = dma.done [#allocation3], 256
    $region25: #{multi_head_attention.1} parent=1 // pred_fallthru
      _
    %484 = vsyncpa [#allocation3], 1

</llo_original>
